<compile_context>
chip_gen: v6e
topology: v6e:2x2x1
jax: 0.10.0
libtpu: 0.0.40
codegen_flags: <defaults>
</compile_context>

<pallas_src>
import jax
import jax.numpy as jnp
from jax.experimental import pallas as pl
from jax.experimental.pallas import tpu as pltpu


def _plane_stats_kernel(pred_ref, target_ref, out_ref):
    """Per-(plane, hw-chunk) partial sums feeding both BCE and Dice.

    pred_ref   : (TP, CHW) pred probabilities in their original dtype
    target_ref : (TP, CHW) target in its original (possibly uint8) dtype
    out_ref    : (1, TP, 6) float32
                 [sum(p*t), sum(p), sum(t),
                  sum(t*(log p - log(1-p))), sum(log(1-p)), max(t)]
    """
    p = pred_ref[...].astype(jnp.float32)      # cast narrow streams in-kernel
    t = target_ref[...].astype(jnp.float32)

    # binary_cross_entropy: PyTorch clamps the logs at -100.
    log_p = jnp.maximum(jnp.log(p), -100.0)
    log_1mp = jnp.maximum(jnp.log(1.0 - p), -100.0)

    stats = jnp.concatenate(
        [
            jnp.sum(p * t, axis=1, keepdims=True),                  # intersection (unscaled)
            jnp.sum(p, axis=1, keepdims=True),                      # sum(pred)
            jnp.sum(t, axis=1, keepdims=True),                      # sum(target) (unscaled)
            jnp.sum(t * (log_p - log_1mp), axis=1, keepdims=True),  # BCE partial A (unscaled)
            jnp.sum(log_1mp, axis=1, keepdims=True),                # BCE partial B
            jnp.max(t, axis=1, keepdims=True),                      # for the >1 test
        ],
        axis=1,
    )
    out_ref[...] = stats[None, :, :]           # single fused store, not 6 masked ones


def _cdiv(a, b):
    return -(-a // b)


def _round_up(x, m):
    return _cdiv(x, m) * m


def _choose_tiling(nc, hw, min_itemsize):
    """Pick (nc_pad, tp, hw_pad, chw).

    Blocks are legal ((8,128) / packed-sublane aligned or full-dim), sized to
    ~4 MiB of f32-equivalent data, and the grid keeps >= 4 steps for sizeable
    problems so v7x megacore sharding and DMA/compute overlap are preserved.
    """
    align = max(8, 32 // max(int(min_itemsize), 1))   # sublane tile of narrowest dtype
    budget = 4 << 20                                  # f32 bytes per pred block
    total_f32 = nc * hw * 4

    # Tiny problem: one block covering everything (block dims == full dims -> legal).
    if total_f32 <= (1 << 20):
        return nc, nc, hw, hw

    # Lane (H*W) chunking: an (align, chw) f32 block must stay within budget.
    chw_cap = max(128, (budget // (4 * align)) // 128 * 128)
    if hw <= chw_cap:
        chw, hw_pad = hw, hw
    else:
        n_hw = _cdiv(hw, chw_cap)
        chw = _round_up(_cdiv(hw, n_hw), 128)
        hw_pad = chw * n_hw

    # Plane (N*C) blocking.
    if nc < align:
        tp, nc_pad = nc, nc                           # full-dim block -> always legal
    else:
        tp_cap = max(align, (budget // (chw * 4)) // align * align)
        tp = min(tp_cap, _round_up(nc, align))
        nc_pad = _round_up(nc, tp)

    # Never collapse a sizeable problem to <4 grid steps (v7x: 2 TCs + overlap).
    for _ in range(8):
        steps = (nc_pad // tp) * (hw_pad // chw)
        if steps >= 4 or total_f32 <= (8 << 20):
            break
        if tp >= 2 * align and (tp // 2) % align == 0:
            tp //= 2
            nc_pad = _round_up(nc, tp)
        elif chw > 128:
            n_hw = (hw_pad // chw) * 2
            chw = _round_up(_cdiv(hw, n_hw), 128)
            hw_pad = chw * n_hw
        else:
            break

    return nc_pad, tp, hw_pad, chw


def _vmem_limit_bytes():
    """Generation-aware scoped-VMEM limit (3/4 of capacity, <= 96 MiB)."""
    try:
        cap = int(pltpu.get_tpu_info().vmem_capacity_bytes)
        return int(min(cap * 3 // 4, 96 << 20))
    except Exception:
        return 48 << 20                               # safe on v5e/v6e/v7x


def segmentation_loss(pred, target, bce_weight=1.0, dice_weight=0.0):
    """Pallas implementation of SegmentationLoss.forward (BCE + Dice)."""
    assert pred.ndim == 4, "expected NCHW input"
    n, c, h, w = pred.shape
    nc, hw = n * c, h * w

    pred2 = pred.reshape(nc, hw)                      # keep original dtype; cast in-kernel
    targ2 = target.reshape(nc, hw)                    # keep original (narrow) dtype

    min_itemsize = min(jnp.dtype(pred.dtype).itemsize, jnp.dtype(target.dtype).itemsize)
    nc_pad, tp, hw_pad, chw = _choose_tiling(nc, hw, min_itemsize)

    if nc_pad != nc or hw_pad != hw:
        # Zero padding is exactly neutral for all six statistics (p=0 -> the
        # clamped logs are multiplied by t=0 or are log(1)=0); pad planes are
        # sliced away before the Dice mean below.
        pred2 = jnp.pad(pred2, ((0, nc_pad - nc), (0, hw_pad - hw)))
        targ2 = jnp.pad(targ2, ((0, nc_pad - nc), (0, hw_pad - hw)))

    gp, gh = nc_pad // tp, hw_pad // chw

    cost = pl.CostEstimate(
        flops=10 * nc_pad * hw_pad,
        transcendentals=2 * nc_pad * hw_pad,
        bytes_accessed=(pred2.size * jnp.dtype(pred2.dtype).itemsize
                        + targ2.size * jnp.dtype(targ2.dtype).itemsize
                        + gh * nc_pad * 6 * 4),
    )

    stats = pl.pallas_call(
        _plane_stats_kernel,
        out_shape=jax.ShapeDtypeStruct((gh, nc_pad, 6), jnp.float32),
        grid_spec=pltpu.PrefetchScalarGridSpec(
            num_scalar_prefetch=0,
            grid=(gp, gh),
            in_specs=[
                pl.BlockSpec((tp, chw), lambda i, j: (i, j)),   # pred (orig dtype)
                pl.BlockSpec((tp, chw), lambda i, j: (i, j)),   # target (orig dtype)
            ],
            out_specs=pl.BlockSpec((1, tp, 6), lambda i, j: (j, i, 0)),
        ),
        compiler_params=pltpu.CompilerParams(
            dimension_semantics=("parallel", "parallel"),       # no carried state
            vmem_limit_bytes=_vmem_limit_bytes(),
        ),
        cost_estimate=cost,
    )(pred2, targ2)

    # Reduce per-chunk partials on a tiny array; drop padded planes.
    sums = jnp.sum(stats[:, :nc, :5], axis=0)        # (nc, 5)
    t_max = jnp.max(stats[:, :nc, 5])

    inter_raw = sums[:, 0]
    p_sum = sums[:, 1]
    t_sum_raw = sums[:, 2]
    bce_a = sums[:, 3]                                # sum t * (log p - log(1-p))
    bce_b = sums[:, 4]                                # sum log(1-p)

    # `if target.max() > 1: target = target / 255.0` — apply the scale to the
    # per-plane partials instead of the whole tensor.
    denom = jnp.where(t_max > 1.0, jnp.float32(255.0), jnp.float32(1.0))

    # BCE mean: sum of -(s*t*log p + (1 - s*t)*log(1-p)) = -(A/denom + B)
    bce_sum = -(jnp.sum(bce_a) / denom + jnp.sum(bce_b))
    bce_loss = bce_sum / jnp.float32(nc * hw)

    # Dice loss.
    smooth = 1.0
    inter = inter_raw / denom
    t_sum = t_sum_raw / denom
    dice_score = (2.0 * inter + smooth) / (p_sum + t_sum + smooth)
    dice_loss = 1.0 - jnp.mean(dice_score)

    # TODO(synk): for H*W >~ 1e6 the per-plane f32 sums of clamped logs can
    # drift vs a tree reduction; chunked accumulation here already mitigates,
    # but an in-kernel two-level (pairwise) accumulator would tighten it.
    return bce_weight * bce_loss + dice_weight * dice_loss


def _reference(pred, target, bce_weight=1.0, dice_weight=0.0):
    """Pure-JAX reference mirroring the PyTorch module."""
    t = target.astype(jnp.float32)
    t = jnp.where(jnp.max(t) > 1.0, t / 255.0, t)
    p = pred.astype(jnp.float32)
    log_p = jnp.maximum(jnp.log(p), -100.0)
    log_1mp = jnp.maximum(jnp.log(1.0 - p), -100.0)
    bce = jnp.mean(-(t * log_p + (1.0 - t) * log_1mp))
    smooth = 1.0
    inter = jnp.sum(p * t, axis=(2, 3))
    dice_score = (2.0 * inter + smooth) / (
        jnp.sum(p, axis=(2, 3)) + jnp.sum(t, axis=(2, 3)) + smooth)
    dice = 1.0 - jnp.mean(dice_score)
    return bce_weight * bce + dice_weight * dice


if __name__ == "__main__":
    key = jax.random.PRNGKey(0)
    k_pred, k_targ = jax.random.split(key)

    # pred: probabilities in (0, 1); target: uint8 {0, 255} segmentation mask
    # (exercises the .float() cast and the /255 normalization path).
    shape = (2, 4, 16, 16)
    pred = jax.nn.sigmoid(jax.random.normal(k_pred, shape, jnp.float32))
    target = (jax.random.bernoulli(k_targ, 0.3, shape) * 255).astype(jnp.uint8)

    # Default weights (bce_weight=1, dice_weight=0.0), as in the module ctor.
    loss = jax.block_until_ready(segmentation_loss(pred, target))
    ref = _reference(pred, target)
    assert jnp.allclose(loss, ref, rtol=1e-4, atol=1e-6), (loss, ref)

    # Also exercise the dice branch with a non-zero dice weight.
    loss2 = jax.block_until_ready(
        segmentation_loss(pred, target, bce_weight=0.7, dice_weight=0.3))
    ref2 = _reference(pred, target, bce_weight=0.7, dice_weight=0.3)
    assert jnp.allclose(loss2, ref2, rtol=1e-4, atol=1e-6), (loss2, ref2)

    print("KERNEL_OK")
</pallas_src>

<mosaic_0001>
module attributes {stable_mosaic.version = 11 : i64} {
  func.func @_plane_stats_kernel(%arg0: i32, %arg1: i32, %arg2: memref<8x256xf32, #tpu.memory_space<vmem>>, %arg3: memref<8x256xi8, #tpu.memory_space<vmem>>, %arg4: memref<1x8x6xf32, #tpu.memory_space<vmem>>) attributes {dimension_semantics = [#tpu.dimension_semantics<parallel>, #tpu.dimension_semantics<parallel>], iteration_bounds = array<i64: 1, 1>, scalar_prefetch = 0 : i64, scratch_operands = 0 : i64, tpu.core_type = #tpu.core_type<tc>, window_params = [{transform_indices = @transform_0, window_bounds = array<i64: 8, 256>}, {transform_indices = @transform_1, window_bounds = array<i64: 8, 256>}, {transform_indices = @transform_2, window_bounds = array<i64: 1, 8, 6>}]} {
    %c0 = arith.constant 0 : index
    %c0_0 = arith.constant 0 : index
    %0 = vector.load %arg2[%c0, %c0_0] : memref<8x256xf32, #tpu.memory_space<vmem>>, vector<8x256xf32>
    %c0_1 = arith.constant 0 : index
    %c0_2 = arith.constant 0 : index
    %1 = vector.load %arg3[%c0_1, %c0_2] : memref<8x256xi8, #tpu.memory_space<vmem>>, vector<8x256xi8>
    %2 = arith.uitofp %1 : vector<8x256xi8> to vector<8x256xf32>
    %3 = math.log %0 : vector<8x256xf32>
    %cst = arith.constant -1.000000e+02 : f32
    %4 = vector.broadcast %cst : f32 to vector<8x256xf32>
    %5 = arith.maximumf %3, %4 : vector<8x256xf32>
    %cst_3 = arith.constant 1.000000e+00 : f32
    %6 = vector.broadcast %cst_3 : f32 to vector<8x256xf32>
    %7 = arith.subf %6, %0 : vector<8x256xf32>
    %8 = math.log %7 : vector<8x256xf32>
    %cst_4 = arith.constant -1.000000e+02 : f32
    %9 = vector.broadcast %cst_4 : f32 to vector<8x256xf32>
    %10 = arith.maximumf %8, %9 : vector<8x256xf32>
    %11 = arith.mulf %0, %2 : vector<8x256xf32>
    %cst_5 = arith.constant dense<0.000000e+00> : vector<8xf32>
    %12 = vector.multi_reduction <add>, %11, %cst_5 [1] : vector<8x256xf32> to vector<8xf32>
    %13 = vector.shape_cast %12 : vector<8xf32> to vector<8x1xf32>
    %cst_6 = arith.constant dense<0.000000e+00> : vector<8xf32>
    %14 = vector.multi_reduction <add>, %0, %cst_6 [1] : vector<8x256xf32> to vector<8xf32>
    %15 = vector.shape_cast %14 : vector<8xf32> to vector<8x1xf32>
    %cst_7 = arith.constant dense<0.000000e+00> : vector<8xf32>
    %16 = vector.multi_reduction <add>, %2, %cst_7 [1] : vector<8x256xf32> to vector<8xf32>
    %17 = vector.shape_cast %16 : vector<8xf32> to vector<8x1xf32>
    %18 = arith.subf %5, %10 : vector<8x256xf32>
    %19 = arith.mulf %2, %18 : vector<8x256xf32>
    %cst_8 = arith.constant dense<0.000000e+00> : vector<8xf32>
    %20 = vector.multi_reduction <add>, %19, %cst_8 [1] : vector<8x256xf32> to vector<8xf32>
    %21 = vector.shape_cast %20 : vector<8xf32> to vector<8x1xf32>
    %cst_9 = arith.constant dense<0.000000e+00> : vector<8xf32>
    %22 = vector.multi_reduction <add>, %10, %cst_9 [1] : vector<8x256xf32> to vector<8xf32>
    %23 = vector.shape_cast %22 : vector<8xf32> to vector<8x1xf32>
    %cst_10 = arith.constant dense<0xFF800000> : vector<8xf32>
    %24 = vector.multi_reduction <maximumf>, %2, %cst_10 [1] : vector<8x256xf32> to vector<8xf32>
    %25 = vector.shape_cast %24 : vector<8xf32> to vector<8x1xf32>
    %26 = tpu.concatenate %13, %15, %17, %21, %23, %25 in 1 : vector<8x1xf32>, vector<8x1xf32>, vector<8x1xf32>, vector<8x1xf32>, vector<8x1xf32>, vector<8x1xf32> -> vector<8x6xf32>
    %27 = vector.shape_cast %26 : vector<8x6xf32> to vector<1x8x6xf32>
    %c0_11 = arith.constant 0 : index
    %c0_12 = arith.constant 0 : index
    %c0_13 = arith.constant 0 : index
    %28 = vector.load %arg4[%c0_11, %c0_12, %c0_13] : memref<1x8x6xf32, #tpu.memory_space<vmem>>, vector<1x8x6xf32>
    tpu.vector_store %arg4[%c0_11, %c0_12, %c0_13], %27 {strides = array<i32>} : memref<1x8x6xf32, #tpu.memory_space<vmem>>, vector<1x8x6xf32>,
    return
  }
  func.func @transform_0(%arg0: i32, %arg1: i32) -> (i32, i32) {
    %c0_i32 = arith.constant 0 : i32
    return %arg0, %arg1 : i32, i32
  }
  func.func @transform_1(%arg0: i32, %arg1: i32) -> (i32, i32) {
    %c0_i32 = arith.constant 0 : i32
    return %arg0, %arg1 : i32, i32
  }
  func.func @transform_2(%arg0: i32, %arg1: i32) -> (i32, i32, i32) {
    %c0_i32 = arith.constant 0 : i32
    %c0_i32_0 = arith.constant 0 : i32
    return %arg1, %arg0, %c0_i32 : i32, i32, i32
  }
}

</mosaic_0001>

<llo_original>
// kernel: tpu_custom_call.1
$region0: #{tpu_custom_call.1}
  #allocation0 [shape = 'u32[]', space=smem, size = 0x4, offset = 0x4, fixed_abs, tag = 'smem constant byte address 0x4 - core index']
  #allocation1 [shape = 'u32[144,128]{1,0:T(1,128)}', space=vmem, size = 0x12000, scoped, tag = 'internal scratch']
  %s0 = inlined_call_operand.hbm [shape: f32[8,256], index: 0, kind: input, shape index: {}]
  %s1 = inlined_call_operand.hbm [shape: u8[8,256], index: 1, kind: input, shape index: {}]
  %s2 = inlined_call_operand.vmem [shape: f32[1,8,6], index: 2, kind: output, shape index: {}]
  %s3 = sld [smem:[#allocation0]]
  $region26: #{tpu_custom_call.1} parent=0
    _
  %s5 = ssub.s32 1, %s3
  %s6 = scalar_select 0, %s5, %s3
  $region1: #{tpu_custom_call.1} parent=0
    #allocation2 [shape = 'u8[8192]{0}', space=vmem, size = 0x2000, scoped, tag = 'input window, operand 0, single buffered']
    #allocation3 [shape = 's32[1]{0}', space=sflag, size = 0x4, scoped, tag = 'scoped memory for tpu_custom_call.1']
    #allocation4 [shape = 'u8[2048]{0}', space=vmem, size = 0x800, scoped, tag = 'input window, operand 1, single buffered']
    #allocation5 [shape = 's32[1]{0}', space=sflag, size = 0x4, scoped, tag = 'scoped memory for tpu_custom_call.1']
    %7 = vsyncpa [#allocation3], 0
    %8 = vsyncpa [#allocation5], 0
    // Predicated region
    $region2: #{tpu_custom_call.1} parent=1 // pred_check
      _
    $region3: #{tpu_custom_call.1} parent=1 // pred_check_branch
      %10 = sbr.rel (0) target = $region5
    $region4: #{tpu_custom_call.1} parent=1 // pred_region
      %s12 = ssub.s32 256, 256
      %13 = vsyncadd [#allocation3], %s12
      %s15 = sshll.u32 [#allocation2], 4
      %s16 = int_to_ptr.vmem [resolvable:$true] %s15
      %18 = dma.hbm_to_vmem [thread:$0]  %s0, 256, %s16, [#allocation3]
    $region5: #{tpu_custom_call.1} parent=1 // pred_fallthru
      _
    // Predicated region
    $region6: #{tpu_custom_call.1} parent=1 // pred_check
      _
    $region7: #{tpu_custom_call.1} parent=1 // pred_check_branch
      %20 = sbr.rel (0) target = $region9
    $region8: #{tpu_custom_call.1} parent=1 // pred_region
      %s22 = ssub.s32 64, 64
      %23 = vsyncadd [#allocation5], %s22
      %s25 = sshll.u32 [#allocation4], 4
      %s26 = int_to_ptr.vmem [resolvable:$true] %s25
      %28 = dma.hbm_to_vmem [thread:$0]  %s1, 64, %s26, [#allocation5]
    $region9: #{tpu_custom_call.1} parent=1 // pred_fallthru
      _
    // Predicated region
    $region10: #{tpu_custom_call.1} parent=1 // pred_check
      _
    $region11: #{tpu_custom_call.1} parent=1 // pred_check_branch
      %30 = sbr.rel (0) target = $region13
    $region12: #{tpu_custom_call.1} parent=1 // pred_region
      %31 = dma.done [#allocation3], 256
    $region13: #{tpu_custom_call.1} parent=1 // pred_fallthru
      _
    // Predicated region
    $region14: #{tpu_custom_call.1} parent=1 // pred_check
      _
    $region15: #{tpu_custom_call.1} parent=1 // pred_check_branch
      %33 = sbr.rel (0) target = $region17
    $region16: #{tpu_custom_call.1} parent=1 // pred_region
      %34 = dma.done [#allocation5], 64
    $region17: #{tpu_custom_call.1} parent=1 // pred_fallthru
      _
    %v35 = vld [vmem:[#allocation2] sm:$0xff]
    %v36 = vld [vmem:[#allocation2 + $0x8] sm:$0xff]
    %v37 = vld [vmem:[#allocation4] sm:$0xf]
    %v38 = vunpack.c.0.s8 %v37
    %v39 = vunpack.c.1.s8 %v37
    %v40 = vand.u32 %v38, 255
    %v41 = vand.u32 %v39, 255
    %v42 = vcvt.s32.f32 %v40
    %v43 = vcvt.s32.f32 %v41
    %v44 = vlog2.pop %v35
    %v45 = vmul.f32 %v44, 0.6931472
    %v46 = vlog2.pop %v36
    %v47 = vmul.f32 %v46, 0.6931472
    %v48 = vmax.f32 %v45, -100.0
    %v49 = vmax.f32 %v47, -100.0
    %v50 = vsub.f32 1.0, %v35
    %v51 = vsub.f32 1.0, %v36
    %v52 = vlog2.pop %v50
    %v53 = vmul.f32 %v52, 0.6931472
    %v54 = vlog2.pop %v51
    %v55 = vmul.f32 %v54, 0.6931472
    %v56 = vmax.f32 %v53, -100.0
    %v57 = vmax.f32 %v55, -100.0
    %v58 = vmul.f32 %v35, %v42
    %v59 = vmul.f32 %v36, %v43
    %v60 = vadd.f32 %v58, %v59
    %61 = vadd.xlane.f32.xlu0 %v60
    %v62 = vpop.xlane.xlu0 %61
    %v63 = vadd.f32 %v35, %v36
    %64 = vadd.xlane.f32.xlu0 %v63
    %v65 = vpop.xlane.xlu0 %64
    %v66 = vadd.f32 %v42, %v43
    %67 = vadd.xlane.f32.xlu0 %v66
    %v68 = vpop.xlane.xlu0 %67
    %v69 = vsub.f32 %v48, %v56
    %v70 = vsub.f32 %v49, %v57
    %v71 = vmul.f32 %v42, %v69
    %v72 = vmul.f32 %v43, %v70
    %v73 = vadd.f32 %v71, %v72
    %74 = vadd.xlane.f32.xlu0 %v73
    %v75 = vpop.xlane.xlu0 %74
    %v76 = vadd.f32 %v56, %v57
    %77 = vadd.xlane.f32.xlu0 %v76
    %v78 = vpop.xlane.xlu0 %77
    %v79 = vmax.f32 %v42, %v43
    %80 = vmax.xlane.f32.xlu0 %v79
    %v81 = vpop.xlane.xlu0 %80
    %vm82 = vcmask 7168
    %v83 = vsel %vm82, %v62, %v65
    %vm84 = vcmask 15360
    %v85 = vsel %vm84, %v83, %v68
    %vm86 = vcmask 23552
    %v87 = vsel %vm86, %v85, %v75
    %vm88 = vcmask 31744
    %v89 = vsel %vm88, %v87, %v78
    %vm90 = vcmask 39936
    %v91 = vsel %vm90, %v89, %v81
    %vm92 = vcmask 48128
    %93 = vst.msk [vmem:[%s2] sm:$0xff] %vm92, %v91
    // Predicated region
    $region18: #{tpu_custom_call.1} parent=1 // pred_check
      _
    $region19: #{tpu_custom_call.1} parent=1 // pred_check_branch
      %95 = sbr.rel (0) target = $region21
    $region20: #{tpu_custom_call.1} parent=1 // pred_region
      _
    $region21: #{tpu_custom_call.1} parent=1 // pred_fallthru
      _
    // Predicated region
    $region22: #{tpu_custom_call.1} parent=1 // pred_check
      _
    $region23: #{tpu_custom_call.1} parent=1 // pred_check_branch
      %97 = sbr.rel (0) target = $region25
    $region24: #{tpu_custom_call.1} parent=1 // pred_region
      _
    $region25: #{tpu_custom_call.1} parent=1 // pred_fallthru
      _
    %98 = vsyncpa [#allocation3], 1
    %99 = vsyncpa [#allocation5], 1

</llo_original>
